<compile_context>
chip_gen: v5e
topology: v5e:2x2
jax: 0.10.0
libtpu: 0.0.40
codegen_flags: <defaults>
</compile_context>

<pallas_src>
import functools

import jax
import jax.numpy as jnp
from jax.experimental import pallas as pl
from jax.experimental.pallas import tpu as pltpu


def _round_up(x, m):
    return ((x + m - 1) // m) * m


def _conv_relu_kernel(x_ref, w_ref, b_ref, o_ref, *, cout, kh, kw, wp, s_out):
    """One image per grid step (in-kernel im2col via shifted lane windows).

    x_ref : (1, Cin, S_in)      bf16  padded activation, (H, W) flattened last
    w_ref : (KH*KW, Cout, Cin)  bf16  per-tap weight matrices (VMEM-resident)
    b_ref : (Cout, 1)           f32   bias (VMEM-resident)
    o_ref : (1, Cout, S_out)    f32   flattened output over the padded grid
    """
    # Bias folded into the accumulator init -> no separate epilogue add.
    acc = jnp.broadcast_to(b_ref[...], (cout, s_out)).astype(jnp.float32)

    # Static, unrolled loop over the KH*KW taps.  Each tap of the convolution
    # is the SAME flattened slab shifted by a constant lane offset, so every
    # slice below is fully static (no dynamic/unaligned indexing).
    for t in range(kh * kw):
        r, c = divmod(t, kw)
        off = r * wp + c
        x_tap = x_ref[0, :, off:off + s_out]          # (Cin, S_out)  bf16
        w_tap = w_ref[t]                              # (Cout, Cin)   bf16
        acc = acc + jnp.dot(w_tap, x_tap, preferred_element_type=jnp.float32)

    o_ref[0] = jnp.maximum(acc, 0.0).astype(o_ref.dtype)


@functools.partial(jax.jit, static_argnames=("padding",))
def conv_block_forward(x, weight, bias, padding):
    """ReLU(Conv2d(x; weight, bias, stride=1, padding)). NCHW in / NCHW out."""
    N, Cin, H, W = x.shape
    Cout, Cin_w, KH, KW = weight.shape
    assert Cin == Cin_w
    p = int(padding)
    Hp, Wp = H + 2 * p, W + 2 * p
    Ho, Wo = Hp - KH + 1, Wp - KW + 1

    # Flattened output grid covers full padded-width rows; only the (Ho, Wo)
    # interior is valid, the (cheap, output-sized) slice at the end drops the
    # rest.  Round to a 128 multiple -> unmasked lane-dense stores.
    s_out = _round_up(Ho * Wp, 128)
    max_off = (KH - 1) * Wp + (KW - 1)                 # last tap's lane shift
    s_in = max(s_out + max_off, Hp * Wp)               # halo so all taps read in-bounds

    # Activation prep (single pass over the activation, no replication):
    # pad spatially, flatten (H, W) into the lane axis, cast to bf16.
    xb = x.astype(jnp.bfloat16)
    xp = jnp.pad(xb, ((0, 0), (0, 0), (p, p), (p, p)))
    xf = xp.reshape(N, Cin, Hp * Wp)
    if s_in > Hp * Wp:
        xf = jnp.pad(xf, ((0, 0), (0, 0), (0, s_in - Hp * Wp)))

    # Per-tap weight matrices (KH*KW, Cout, Cin) in bf16; bias (Cout, 1) in f32.
    w3 = weight.astype(jnp.bfloat16).transpose(2, 3, 0, 1).reshape(KH * KW, Cout, Cin)
    b2 = bias.astype(jnp.float32).reshape(Cout, 1)

    # Rough per-step VMEM budget check (double-buffered activation + output,
    # resident weights) against the smallest scoped default (v5e 16 MiB).
    vmem_est = (2 * Cin * _round_up(s_in, 128) * 2          # activation, bf16, x2 bufs
                + 2 * Cout * s_out * 4                      # output tile, f32, x2 bufs
                + KH * KW * max(Cout, 8) * _round_up(Cin, 128) * 2)  # weights
    assert vmem_est < 12 * 1024 * 1024, vmem_est

    kernel = functools.partial(
        _conv_relu_kernel, cout=Cout, kh=KH, kw=KW, wp=Wp, s_out=s_out)

    y_flat = pl.pallas_call(
        kernel,
        out_shape=jax.ShapeDtypeStruct((N, Cout, s_out), jnp.float32),
        grid=(N,),
        in_specs=[
            pl.BlockSpec((1, Cin, s_in), lambda n: (n, 0, 0)),         # activation
            pl.BlockSpec((KH * KW, Cout, Cin), lambda n: (0, 0, 0)),   # weights (resident)
            pl.BlockSpec((Cout, 1), lambda n: (0, 0)),                 # bias    (resident)
        ],
        out_specs=pl.BlockSpec((1, Cout, s_out), lambda n: (n, 0, 0)),
        compiler_params=pltpu.CompilerParams(
            dimension_semantics=("parallel",)),
    )(xf, w3, b2)

    # Valid-interior extraction: output already in NCHW order, so this is a
    # contiguous reshape plus a narrow slice (no transpose copy).
    y = y_flat[:, :, :Ho * Wp].reshape(N, Cout, Ho, Wp)[:, :, :, :Wo]
    return y


def conv_block_ref(x, weight, bias, padding):
    """Pure-JAX mirror of the PyTorch forward: ReLU(Conv2d(x))."""
    out = jax.lax.conv_general_dilated(
        x.astype(jnp.float32), weight.astype(jnp.float32),
        window_strides=(1, 1),
        padding=[(padding, padding), (padding, padding)],
        dimension_numbers=("NCHW", "OIHW", "NCHW"),
        precision=jax.lax.Precision.HIGHEST)
    return jnp.maximum(out + bias[None, :, None, None], 0.0)


if __name__ == "__main__":
    # ConvBlock(input=4, output=8, kernel_size=3, padding=1) on a (2,4,16,16) input.
    N, Cin, Cout, H, W = 2, 4, 8, 16, 16
    KH = KW = 3
    padding = 1

    key = jax.random.PRNGKey(0)
    kx, kw_, kb = jax.random.split(key, 3)
    x = jax.random.normal(kx, (N, Cin, H, W), dtype=jnp.float32)

    fan_in = Cin * KH * KW
    bound = float(fan_in) ** -0.5          # ~ PyTorch Conv2d default init range
    weight = jax.random.uniform(kw_, (Cout, Cin, KH, KW), jnp.float32, -bound, bound)
    bias = jax.random.uniform(kb, (Cout,), jnp.float32, -bound, bound)

    y = conv_block_forward(x, weight, bias, padding=padding)
    y = jax.block_until_ready(y)
    assert y.shape == (N, Cout, H, W), y.shape

    # Primary check: reference with the same bf16-rounded operands (the kernel
    # feeds the MXU bf16 inputs with f32 accumulation).
    xb = x.astype(jnp.bfloat16).astype(jnp.float32)
    wb = weight.astype(jnp.bfloat16).astype(jnp.float32)
    y_ref = conv_block_ref(xb, wb, bias, padding)
    err = float(jnp.max(jnp.abs(y - y_ref)))
    assert jnp.allclose(y, y_ref, atol=1e-3, rtol=1e-3), f"max abs err {err}"

    # Loose sanity check against full-f32 math (bf16 input rounding dominates).
    y_ref32 = conv_block_ref(x, weight, bias, padding)
    err32 = float(jnp.max(jnp.abs(y - y_ref32)))
    assert jnp.allclose(y, y_ref32, atol=5e-2, rtol=5e-2), f"max abs err {err32}"

    print("KERNEL_OK")
</pallas_src>

<mosaic_0001>
module attributes {stable_mosaic.version = 11 : i64} {
  func.func @_conv_relu_kernel(%arg0: i32, %arg1: memref<1x4x422xbf16, #tpu.memory_space<vmem>>, %arg2: memref<9x8x4xbf16, #tpu.memory_space<vmem>>, %arg3: memref<8x1xf32, #tpu.memory_space<vmem>>, %arg4: memref<1x8x384xf32, #tpu.memory_space<vmem>>) attributes {dimension_semantics = [#tpu.dimension_semantics<parallel>], iteration_bounds = array<i64: 2>, scalar_prefetch = 0 : i64, scratch_operands = 0 : i64, tpu.core_type = #tpu.core_type<tc>, window_params = [{transform_indices = @transform_0, window_bounds = array<i64: 1, 4, 422>}, {pipeline_mode = #tpu.pipeline_mode<synchronous>, transform_indices = @transform_1, window_bounds = array<i64: 9, 8, 4>}, {pipeline_mode = #tpu.pipeline_mode<synchronous>, transform_indices = @transform_2, window_bounds = array<i64: 8, 1>}, {transform_indices = @transform_3, window_bounds = array<i64: 1, 8, 384>}]} {
    %c0 = arith.constant 0 : index
    %c0_0 = arith.constant 0 : index
    %0 = vector.load %arg3[%c0, %c0_0] : memref<8x1xf32, #tpu.memory_space<vmem>>, vector<8x1xf32>
    %1 = vector.shape_cast %0 : vector<8x1xf32> to vector<8x1xf32>
    %2 = vector.broadcast %1 : vector<8x1xf32> to vector<8x384xf32>
    %c0_1 = arith.constant 0 : index
    %c0_2 = arith.constant 0 : index
    %c0_3 = arith.constant 0 : index
    %3 = vector.load %arg1[%c0_1, %c0_2, %c0_3] : memref<1x4x422xbf16, #tpu.memory_space<vmem>>, vector<1x4x384xbf16>
    %4 = vector.shape_cast %3 : vector<1x4x384xbf16> to vector<4x384xbf16>
    %c0_4 = arith.constant 0 : index
    %c0_5 = arith.constant 0 : index
    %c0_6 = arith.constant 0 : index
    %5 = vector.load %arg2[%c0_4, %c0_5, %c0_6] : memref<9x8x4xbf16, #tpu.memory_space<vmem>>, vector<1x8x4xbf16>
    %6 = vector.shape_cast %5 : vector<1x8x4xbf16> to vector<8x4xbf16>
    %cst = arith.constant dense<0.000000e+00> : vector<8x384xf32>
    %7 = tpu.matmul %6, %4, %cst {dimension_numbers = #tpu.dot_dimension_numbers<[1], [0], [0], [1], [0, 0, 1, 1], [], []>} : vector<8x4xbf16>, vector<4x384xbf16>, vector<8x384xf32> -> vector<8x384xf32>
    %8 = arith.addf %2, %7 : vector<8x384xf32>
    %c0_7 = arith.constant 0 : index
    %c0_8 = arith.constant 0 : index
    %c1 = arith.constant 1 : index
    %9 = vector.load %arg1[%c0_7, %c0_8, %c1] : memref<1x4x422xbf16, #tpu.memory_space<vmem>>, vector<1x4x384xbf16>
    %10 = vector.shape_cast %9 : vector<1x4x384xbf16> to vector<4x384xbf16>
    %c1_9 = arith.constant 1 : index
    %c0_10 = arith.constant 0 : index
    %c0_11 = arith.constant 0 : index
    %11 = vector.load %arg2[%c1_9, %c0_10, %c0_11] : memref<9x8x4xbf16, #tpu.memory_space<vmem>>, vector<1x8x4xbf16>
    %12 = vector.shape_cast %11 : vector<1x8x4xbf16> to vector<8x4xbf16>
    %cst_12 = arith.constant dense<0.000000e+00> : vector<8x384xf32>
    %13 = tpu.matmul %12, %10, %cst_12 {dimension_numbers = #tpu.dot_dimension_numbers<[1], [0], [0], [1], [0, 0, 1, 1], [], []>} : vector<8x4xbf16>, vector<4x384xbf16>, vector<8x384xf32> -> vector<8x384xf32>
    %14 = arith.addf %8, %13 : vector<8x384xf32>
    %c0_13 = arith.constant 0 : index
    %c0_14 = arith.constant 0 : index
    %c2 = arith.constant 2 : index
    %15 = vector.load %arg1[%c0_13, %c0_14, %c2] : memref<1x4x422xbf16, #tpu.memory_space<vmem>>, vector<1x4x384xbf16>
    %16 = vector.shape_cast %15 : vector<1x4x384xbf16> to vector<4x384xbf16>
    %c2_15 = arith.constant 2 : index
    %c0_16 = arith.constant 0 : index
    %c0_17 = arith.constant 0 : index
    %17 = vector.load %arg2[%c2_15, %c0_16, %c0_17] : memref<9x8x4xbf16, #tpu.memory_space<vmem>>, vector<1x8x4xbf16>
    %18 = vector.shape_cast %17 : vector<1x8x4xbf16> to vector<8x4xbf16>
    %cst_18 = arith.constant dense<0.000000e+00> : vector<8x384xf32>
    %19 = tpu.matmul %18, %16, %cst_18 {dimension_numbers = #tpu.dot_dimension_numbers<[1], [0], [0], [1], [0, 0, 1, 1], [], []>} : vector<8x4xbf16>, vector<4x384xbf16>, vector<8x384xf32> -> vector<8x384xf32>
    %20 = arith.addf %14, %19 : vector<8x384xf32>
    %c0_19 = arith.constant 0 : index
    %c0_20 = arith.constant 0 : index
    %c18 = arith.constant 18 : index
    %21 = vector.load %arg1[%c0_19, %c0_20, %c18] : memref<1x4x422xbf16, #tpu.memory_space<vmem>>, vector<1x4x384xbf16>
    %22 = vector.shape_cast %21 : vector<1x4x384xbf16> to vector<4x384xbf16>
    %c3 = arith.constant 3 : index
    %c0_21 = arith.constant 0 : index
    %c0_22 = arith.constant 0 : index
    %23 = vector.load %arg2[%c3, %c0_21, %c0_22] : memref<9x8x4xbf16, #tpu.memory_space<vmem>>, vector<1x8x4xbf16>
    %24 = vector.shape_cast %23 : vector<1x8x4xbf16> to vector<8x4xbf16>
    %cst_23 = arith.constant dense<0.000000e+00> : vector<8x384xf32>
    %25 = tpu.matmul %24, %22, %cst_23 {dimension_numbers = #tpu.dot_dimension_numbers<[1], [0], [0], [1], [0, 0, 1, 1], [], []>} : vector<8x4xbf16>, vector<4x384xbf16>, vector<8x384xf32> -> vector<8x384xf32>
    %26 = arith.addf %20, %25 : vector<8x384xf32>
    %c0_24 = arith.constant 0 : index
    %c0_25 = arith.constant 0 : index
    %c19 = arith.constant 19 : index
    %27 = vector.load %arg1[%c0_24, %c0_25, %c19] : memref<1x4x422xbf16, #tpu.memory_space<vmem>>, vector<1x4x384xbf16>
    %28 = vector.shape_cast %27 : vector<1x4x384xbf16> to vector<4x384xbf16>
    %c4 = arith.constant 4 : index
    %c0_26 = arith.constant 0 : index
    %c0_27 = arith.constant 0 : index
    %29 = vector.load %arg2[%c4, %c0_26, %c0_27] : memref<9x8x4xbf16, #tpu.memory_space<vmem>>, vector<1x8x4xbf16>
    %30 = vector.shape_cast %29 : vector<1x8x4xbf16> to vector<8x4xbf16>
    %cst_28 = arith.constant dense<0.000000e+00> : vector<8x384xf32>
    %31 = tpu.matmul %30, %28, %cst_28 {dimension_numbers = #tpu.dot_dimension_numbers<[1], [0], [0], [1], [0, 0, 1, 1], [], []>} : vector<8x4xbf16>, vector<4x384xbf16>, vector<8x384xf32> -> vector<8x384xf32>
    %32 = arith.addf %26, %31 : vector<8x384xf32>
    %c0_29 = arith.constant 0 : index
    %c0_30 = arith.constant 0 : index
    %c20 = arith.constant 20 : index
    %33 = vector.load %arg1[%c0_29, %c0_30, %c20] : memref<1x4x422xbf16, #tpu.memory_space<vmem>>, vector<1x4x384xbf16>
    %34 = vector.shape_cast %33 : vector<1x4x384xbf16> to vector<4x384xbf16>
    %c5 = arith.constant 5 : index
    %c0_31 = arith.constant 0 : index
    %c0_32 = arith.constant 0 : index
    %35 = vector.load %arg2[%c5, %c0_31, %c0_32] : memref<9x8x4xbf16, #tpu.memory_space<vmem>>, vector<1x8x4xbf16>
    %36 = vector.shape_cast %35 : vector<1x8x4xbf16> to vector<8x4xbf16>
    %cst_33 = arith.constant dense<0.000000e+00> : vector<8x384xf32>
    %37 = tpu.matmul %36, %34, %cst_33 {dimension_numbers = #tpu.dot_dimension_numbers<[1], [0], [0], [1], [0, 0, 1, 1], [], []>} : vector<8x4xbf16>, vector<4x384xbf16>, vector<8x384xf32> -> vector<8x384xf32>
    %38 = arith.addf %32, %37 : vector<8x384xf32>
    %c0_34 = arith.constant 0 : index
    %c0_35 = arith.constant 0 : index
    %c36 = arith.constant 36 : index
    %39 = vector.load %arg1[%c0_34, %c0_35, %c36] : memref<1x4x422xbf16, #tpu.memory_space<vmem>>, vector<1x4x384xbf16>
    %40 = vector.shape_cast %39 : vector<1x4x384xbf16> to vector<4x384xbf16>
    %c6 = arith.constant 6 : index
    %c0_36 = arith.constant 0 : index
    %c0_37 = arith.constant 0 : index
    %41 = vector.load %arg2[%c6, %c0_36, %c0_37] : memref<9x8x4xbf16, #tpu.memory_space<vmem>>, vector<1x8x4xbf16>
    %42 = vector.shape_cast %41 : vector<1x8x4xbf16> to vector<8x4xbf16>
    %cst_38 = arith.constant dense<0.000000e+00> : vector<8x384xf32>
    %43 = tpu.matmul %42, %40, %cst_38 {dimension_numbers = #tpu.dot_dimension_numbers<[1], [0], [0], [1], [0, 0, 1, 1], [], []>} : vector<8x4xbf16>, vector<4x384xbf16>, vector<8x384xf32> -> vector<8x384xf32>
    %44 = arith.addf %38, %43 : vector<8x384xf32>
    %c0_39 = arith.constant 0 : index
    %c0_40 = arith.constant 0 : index
    %c37 = arith.constant 37 : index
    %45 = vector.load %arg1[%c0_39, %c0_40, %c37] : memref<1x4x422xbf16, #tpu.memory_space<vmem>>, vector<1x4x384xbf16>
    %46 = vector.shape_cast %45 : vector<1x4x384xbf16> to vector<4x384xbf16>
    %c7 = arith.constant 7 : index
    %c0_41 = arith.constant 0 : index
    %c0_42 = arith.constant 0 : index
    %47 = vector.load %arg2[%c7, %c0_41, %c0_42] : memref<9x8x4xbf16, #tpu.memory_space<vmem>>, vector<1x8x4xbf16>
    %48 = vector.shape_cast %47 : vector<1x8x4xbf16> to vector<8x4xbf16>
    %cst_43 = arith.constant dense<0.000000e+00> : vector<8x384xf32>
    %49 = tpu.matmul %48, %46, %cst_43 {dimension_numbers = #tpu.dot_dimension_numbers<[1], [0], [0], [1], [0, 0, 1, 1], [], []>} : vector<8x4xbf16>, vector<4x384xbf16>, vector<8x384xf32> -> vector<8x384xf32>
    %50 = arith.addf %44, %49 : vector<8x384xf32>
    %c0_44 = arith.constant 0 : index
    %c0_45 = arith.constant 0 : index
    %c38 = arith.constant 38 : index
    %51 = vector.load %arg1[%c0_44, %c0_45, %c38] : memref<1x4x422xbf16, #tpu.memory_space<vmem>>, vector<1x4x384xbf16>
    %52 = vector.shape_cast %51 : vector<1x4x384xbf16> to vector<4x384xbf16>
    %c8 = arith.constant 8 : index
    %c0_46 = arith.constant 0 : index
    %c0_47 = arith.constant 0 : index
    %53 = vector.load %arg2[%c8, %c0_46, %c0_47] : memref<9x8x4xbf16, #tpu.memory_space<vmem>>, vector<1x8x4xbf16>
    %54 = vector.shape_cast %53 : vector<1x8x4xbf16> to vector<8x4xbf16>
    %cst_48 = arith.constant dense<0.000000e+00> : vector<8x384xf32>
    %55 = tpu.matmul %54, %52, %cst_48 {dimension_numbers = #tpu.dot_dimension_numbers<[1], [0], [0], [1], [0, 0, 1, 1], [], []>} : vector<8x4xbf16>, vector<4x384xbf16>, vector<8x384xf32> -> vector<8x384xf32>
    %56 = arith.addf %50, %55 : vector<8x384xf32>
    %cst_49 = arith.constant 0.000000e+00 : f32
    %57 = vector.broadcast %cst_49 : f32 to vector<8x384xf32>
    %58 = arith.maximumf %56, %57 : vector<8x384xf32>
    %c0_50 = arith.constant 0 : index
    %c0_51 = arith.constant 0 : index
    %c0_52 = arith.constant 0 : index
    %59 = vector.load %arg4[%c0_50, %c0_51, %c0_52] : memref<1x8x384xf32, #tpu.memory_space<vmem>>, vector<1x8x384xf32>
    %60 = vector.shape_cast %59 : vector<1x8x384xf32> to vector<8x384xf32>
    %61 = vector.shape_cast %58 : vector<8x384xf32> to vector<1x8x384xf32>
    tpu.vector_store %arg4[%c0_50, %c0_51, %c0_52], %61 {strides = array<i32>} : memref<1x8x384xf32, #tpu.memory_space<vmem>>, vector<1x8x384xf32>,
    return
  }
  func.func @transform_0(%arg0: i32) -> (i32, i32, i32) {
    %c0_i32 = arith.constant 0 : i32
    %c0_i32_0 = arith.constant 0 : i32
    %c0_i32_1 = arith.constant 0 : i32
    return %arg0, %c0_i32, %c0_i32_0 : i32, i32, i32
  }
  func.func @transform_1(%arg0: i32) -> (i32, i32, i32) {
    %c0_i32 = arith.constant 0 : i32
    %c0_i32_0 = arith.constant 0 : i32
    %c0_i32_1 = arith.constant 0 : i32
    %c0_i32_2 = arith.constant 0 : i32
    return %c0_i32, %c0_i32_0, %c0_i32_1 : i32, i32, i32
  }
  func.func @transform_2(%arg0: i32) -> (i32, i32) {
    %c0_i32 = arith.constant 0 : i32
    %c0_i32_0 = arith.constant 0 : i32
    %c0_i32_1 = arith.constant 0 : i32
    return %c0_i32, %c0_i32_0 : i32, i32
  }
  func.func @transform_3(%arg0: i32) -> (i32, i32, i32) {
    %c0_i32 = arith.constant 0 : i32
    %c0_i32_0 = arith.constant 0 : i32
    %c0_i32_1 = arith.constant 0 : i32
    return %arg0, %c0_i32, %c0_i32_0 : i32, i32, i32
  }
}

</mosaic_0001>

<llo_original>
// kernel: conv_block_forward.1
$region0: #{conv_block_forward.1}
  #allocation0 [shape = 'u32[]', space=smem, size = 0x4, offset = 0x4, fixed_abs, tag = 'smem constant byte address 0x4 - core index']
  #allocation1 [shape = 'u32[72,128]{1,0:T(1,128)}', space=vmem, size = 0x9000, scoped, tag = 'internal scratch']
  %s0 = inlined_call_operand.vmem [shape: bf16[2,4,422], index: 0, kind: input, shape index: {}]
  %s1 = inlined_call_operand.vmem [shape: bf16[9,8,4], index: 1, kind: input, shape index: {}]
  %s2 = inlined_call_operand.vmem [shape: f32[8,1], index: 2, kind: input, shape index: {}]
  %s3 = inlined_call_operand.vmem [shape: f32[2,8,384], index: 3, kind: output, shape index: {}]
  %s4 = sld [smem:[#allocation0]]
  $region45: #{conv_block_forward.1} parent=0
    _
  %s6 = ssub.s32 1, %s4
  %s7 = scalar_select 0, %s6, %s4
  loop: start=0, step=1, limit=4
  $region2: #{conv_block_forward.1} parent=0 // loop_pre_header
    _
  $region3: #{conv_block_forward.1} parent=0 // loop_header
    %s9 = sphi 0, %s13
    %p10 = scmp.ge.s32.totalorder %s9, 4
    %s19 = sphi 0, %s21
    %s22 = sphi 0, %s19
    %s23 = sphi 0, %s22
    %s39 = sphi 0, %s23
    %s43 = sphi 0, %s43
    %s45 = sphi 0, %s43
    %s46 = sphi 0, %s45
    %s60 = sphi 0, %s46
    %s64 = sphi 0, %s64
    %s66 = sphi 0, %s64
    %s67 = sphi 0, %s66
    %s81 = sphi 0, %s67
    %s87 = sphi 0, %s89
    %s90 = sphi 0, %s87
    %s91 = sphi 0, %s90
    %s107 = sphi 0, %s91
  $region4: #{conv_block_forward.1} parent=0 // loop_header_branch
    %12 = sbr.rel (%p10) target = $region8
  $region5: #{conv_block_forward.1} parent=0 // loop_body
    %s14 = ssub.s32 %s9, 1
    %s15 = ssub.s32 %s9, 2
    %s16 = sadd.s32 %s9, 1
    %s17 = ssub.s32 %s9, %s16
    %p18 = scmp.eq.s32.totalorder %s17, 0
    %s20 = sadd.s32 %s19, 1
    %s21 = scalar_select %p18, %s19, %s20
    %p24 = pneg %p18
    %p25 = scmp.eq.s32.totalorder %s9, 1
    %p26 = por %p24, %p25
    %p27 = scmp.ne.s32.totalorder %s19, %s22
    %p28 = scmp.eq.s32.totalorder %s9, 0
    %p29 = por %p27, %p28
    %p30 = scmp.ne.s32.totalorder %s19, %s22
    %p31 = scmp.eq.s32.totalorder %s14, 1
    %p32 = por %p30, %p31
    %p33 = scmp.ne.s32.totalorder %s22, %s23
    %p34 = scmp.eq.s32.totalorder %s14, 0
    %p35 = por %p33, %p34
    %p36 = scmp.ne.s32.totalorder %s22, %s23
    %p37 = scmp.eq.s32.totalorder %s15, 1
    %p38 = por %p36, %p37
    %p40 = scmp.ne.s32.totalorder %s23, %s39
    %p41 = scmp.eq.s32.totalorder %s15, 0
    %p42 = por %p40, %p41
    %s44 = sadd.s32 %s43, 1
    %p47 = scmp.eq.s32.totalorder %s9, 1
    %p48 = scmp.ne.s32.totalorder %s43, %s45
    %p49 = scmp.eq.s32.totalorder %s9, 0
    %p50 = por %p48, %p49
    %p51 = scmp.ne.s32.totalorder %s43, %s45
    %p52 = scmp.eq.s32.totalorder %s14, 1
    %p53 = por %p51, %p52
    %p54 = scmp.ne.s32.totalorder %s45, %s46
    %p55 = scmp.eq.s32.totalorder %s14, 0
    %p56 = por %p54, %p55
    %p57 = scmp.ne.s32.totalorder %s45, %s46
    %p58 = scmp.eq.s32.totalorder %s15, 1
    %p59 = por %p57, %p58
    %p61 = scmp.ne.s32.totalorder %s46, %s60
    %p62 = scmp.eq.s32.totalorder %s15, 0
    %p63 = por %p61, %p62
    %s65 = sadd.s32 %s64, 1
    %p68 = scmp.eq.s32.totalorder %s9, 1
    %p69 = scmp.ne.s32.totalorder %s64, %s66
    %p70 = scmp.eq.s32.totalorder %s9, 0
    %p71 = por %p69, %p70
    %p72 = scmp.ne.s32.totalorder %s64, %s66
    %p73 = scmp.eq.s32.totalorder %s14, 1
    %p74 = por %p72, %p73
    %p75 = scmp.ne.s32.totalorder %s66, %s67
    %p76 = scmp.eq.s32.totalorder %s14, 0
    %p77 = por %p75, %p76
    %p78 = scmp.ne.s32.totalorder %s66, %s67
    %p79 = scmp.eq.s32.totalorder %s15, 1
    %p80 = por %p78, %p79
    %p82 = scmp.ne.s32.totalorder %s67, %s81
    %p83 = scmp.eq.s32.totalorder %s15, 0
    %p84 = por %p82, %p83
    %s85 = ssub.s32 %s9, %s16
    %p86 = scmp.eq.s32.totalorder %s85, 0
    %s88 = sadd.s32 %s87, 1
    %s89 = scalar_select %p86, %s87, %s88
    %p92 = pneg %p86
    %p93 = scmp.eq.s32.totalorder %s9, 1
    %p94 = por %p92, %p93
    %p95 = scmp.ne.s32.totalorder %s87, %s90
    %p96 = scmp.eq.s32.totalorder %s9, 0
    %p97 = por %p95, %p96
    %p98 = scmp.ne.s32.totalorder %s87, %s90
    %p99 = scmp.eq.s32.totalorder %s14, 1
    %p100 = por %p98, %p99
    %p101 = scmp.ne.s32.totalorder %s90, %s91
    %p102 = scmp.eq.s32.totalorder %s14, 0
    %p103 = por %p101, %p102
    %p104 = scmp.ne.s32.totalorder %s90, %s91
    %p105 = scmp.eq.s32.totalorder %s15, 1
    %p106 = por %p104, %p105
    %p108 = scmp.ne.s32.totalorder %s91, %s107
    %p109 = scmp.eq.s32.totalorder %s15, 0
    %p110 = por %p108, %p109
    %p111 = scmp.le.s32.totalorder 1, %s9
    %p112 = scmp.lt.s32.totalorder %s9, 3
    %p113 = pnand %p111, %p112
    %p114 = pneg %p113
    // Predicated region
    $region9: #{conv_block_forward.1} parent=5 // pred_check
      _
    $region10: #{conv_block_forward.1} parent=5 // pred_check_branch
      %116 = sbr.rel (%p113) target = $region12
    $region11: #{conv_block_forward.1} parent=5 // pred_region
      %s117 = ssub.s32 %s9, 1
      // Predicated region
      $region13: #{conv_block_forward.1} parent=11 // pred_check
        %p118 = pneg %p56
      $region14: #{conv_block_forward.1} parent=11 // pred_check_branch
        %120 = sbr.rel (%p118) target = $region16
      $region15: #{conv_block_forward.1} parent=11 // pred_region
        _
      $region16: #{conv_block_forward.1} parent=11 // pred_fallthru
        _
      // Predicated region
      $region17: #{conv_block_forward.1} parent=11 // pred_check
        %p121 = pneg %p77
      $region18: #{conv_block_forward.1} parent=11 // pred_check_branch
        %123 = sbr.rel (%p121) target = $region20
      $region19: #{conv_block_forward.1} parent=11 // pred_region
        _
      $region20: #{conv_block_forward.1} parent=11 // pred_fallthru
        _
    $region12: #{conv_block_forward.1} parent=5 // pred_fallthru
      _
    %p124 = scmp.lt.s32.totalorder %s9, 2
    // Predicated region
    $region21: #{conv_block_forward.1} parent=5 // pred_check
      %p125 = pneg %p124
    $region22: #{conv_block_forward.1} parent=5 // pred_check_branch
      %127 = sbr.rel (%p125) target = $region24
    $region23: #{conv_block_forward.1} parent=5 // pred_region
      // Predicated region
      $region25: #{conv_block_forward.1} parent=23 // pred_check
        %p128 = pneg %p29
      $region26: #{conv_block_forward.1} parent=23 // pred_check_branch
        %130 = sbr.rel (%p128) target = $region28
      $region27: #{conv_block_forward.1} parent=23 // pred_region
        %p131 = scmp.lt.s32.totalorder %s9, 1
        %s132 = scalar_select %p131, %s9, 1
        %s133 = smul.addr %s132, 4
        %s134 = smul.addr %s133, 2
        %s135 = scalar_lea.vmem %s0, %s134
      $region28: #{conv_block_forward.1} parent=23 // pred_fallthru
        _
    $region24: #{conv_block_forward.1} parent=5 // pred_fallthru
      _
    %p136 = scmp.le.s32.totalorder 1, %s9
    %p137 = scmp.lt.s32.totalorder %s9, 3
    %p138 = pnand %p136, %p137
    %p139 = pneg %p138
    // Predicated region
    $region29: #{conv_block_forward.1} parent=5 // pred_check
      _
    $region30: #{conv_block_forward.1} parent=5 // pred_check_branch
      %141 = sbr.rel (%p138) target = $region32
    $region31: #{conv_block_forward.1} parent=5 // pred_region
      %s142 = ssub.s32 %s9, 1
      %p143 = scmp.lt.s32.totalorder %s14, 1
      %s144 = scalar_select %p143, %s14, 1
      %s145 = smul.addr %s144, 4
      %s146 = smul.addr %s145, 2
      %s147 = scalar_lea.vmem %s0, %s146
      %p148 = pneg %p35
      %p149 = pneg %p32
      %p150 = pneg %p56
      %p151 = pneg %p53
      %p152 = pneg %p77
      %p153 = pneg %p74
      %p154 = pneg %p103
      %p155 = pneg %p100
      %p156 = scmp.lt.s32.totalorder %s14, 1
      %s157 = scalar_select %p156, %s14, 1
      %s158 = smul.addr %s157, 3
      %s159 = smul.addr %s158, 8
      %s160 = scalar_lea.vmem %s3, %s159
      %p161 = scmp.lt.s32.totalorder %s14, 1
      %s162 = scalar_select %p161, %s14, 1
      %s163 = smul.addr %s162, 4
      %s164 = smul.addr %s163, 2
      %s165 = scalar_lea.vmem %s0, %s164
      %p166 = scmp.lt.s32.totalorder %s14, 1
      %s167 = scalar_select %p166, %s14, 1
      %s168 = smul.addr %s167, 3
      %s169 = smul.addr %s168, 8
      %s170 = scalar_lea.vmem %s3, %s169
      %v172 = vld [vmem:[%s2] sm:$0xff]
      %174 = vset.pattern.permute.xlu0 0
      %175 = vperm.xlu0 %174, %v172
      %v176 = vpop.permute.xlu0 %175
      %v178 = vld [vmem:[%s165] sm:$0x3f]
      %v179 = vld [vmem:[%s1] sm:$0xf]
      %181 = vst [vmem:[#allocation1] ss:$4 sm:$0xff] %v178
      %v182 = vld.sshfl [vmem:[#allocation1] sm:$0xff pattern:$0x73625140]
      %v183 = vld.sshfl [vmem:[#allocation1 + $0x8] sm:$0xff pattern:$0x73625140]
      %v184 = vld.sshfl [vmem:[#allocation1 + $0x10] sm:$0xff pattern:$0x73625140]
      %vm185 = vcmask 31744
      %v187 = vsel %vm185, %v179, 0
      %vm189 = vcmask 1041408
      %v190 = vsel %vm189, %v182, 0
      %v192 = vsel %vm189, %v183, 0
      %v194 = vsel %vm189, %v184, 0
      %196 = vmatpush.bf16.msra.mxu0 0
      %197 = vmatpush.bf16.msra.mxu0 0
      %198 = vmatpush.bf16.msra.mxu0 0
      %199 = vmatpush.bf16.msra.mxu0 0
      %200 = vmatpush.bf16.msra.mxu0 0
      %201 = vmatpush.bf16.msra.mxu0 0
      %202 = vmatpush.bf16.msra.mxu0 0
      %203 = vmatpush.bf16.msra.mxu0 %v190
      %204 = vmatmul.bf16.gmra.mxu0 %v187
      %v205 = vpop.f32.mrf.mxu0
      %v206 = vadd.f32 0.0, %v205
      %v207 = vpop.f32.mrf.mxu0
      %208 = vdwg.mxu0
      %209 = vmatpush.bf16.msra.mxu0 0
      %210 = vmatpush.bf16.msra.mxu0 0
      %211 = vmatpush.bf16.msra.mxu0 0
      %212 = vmatpush.bf16.msra.mxu0 0
      %213 = vmatpush.bf16.msra.mxu0 0
      %214 = vmatpush.bf16.msra.mxu0 0
      %215 = vmatpush.bf16.msra.mxu0 0
      %216 = vmatpush.bf16.msra.mxu0 %v192
      %217 = vmatmul.bf16.gmra.mxu0 %v187
      %v218 = vpop.f32.mrf.mxu0
      %v219 = vadd.f32 0.0, %v218
      %v220 = vpop.f32.mrf.mxu0
      %221 = vdwg.mxu0
      %222 = vmatpush.bf16.msra.mxu0 0
      %223 = vmatpush.bf16.msra.mxu0 0
      %224 = vmatpush.bf16.msra.mxu0 0
      %225 = vmatpush.bf16.msra.mxu0 0
      %226 = vmatpush.bf16.msra.mxu0 0
      %227 = vmatpush.bf16.msra.mxu0 0
      %228 = vmatpush.bf16.msra.mxu0 0
      %229 = vmatpush.bf16.msra.mxu0 %v194
      %230 = vmatmul.bf16.gmra.mxu0 %v187
      %v231 = vpop.f32.mrf.mxu0
      %v232 = vadd.f32 0.0, %v231
      %v233 = vpop.f32.mrf.mxu0
      %234 = vdwg.mxu0
      %v235 = vadd.f32 %v176, %v206
      %v236 = vadd.f32 %v176, %v219
      %v237 = vadd.f32 %v176, %v232
      %v238 = vld [vmem:[%s165] sm:$0xff]
      %s239 = scalar_lea.vmem %s1, 4
      %v240 = vld [vmem:[%s239] sm:$0xf]
      %242 = vst [vmem:[#allocation1] ss:$4 sm:$0xff] %v238
      %v243 = vld.sshfl [vmem:[#allocation1] sm:$0xff pattern:$0x73625140]
      %v245 = vld.sshfl [vmem:[#allocation1 + $0x8] sm:$0xff pattern:$0x73625140]
      %v247 = vld.sshfl [vmem:[#allocation1 + $0x10] sm:$0xff pattern:$0x73625140]
      %v249 = vld.sshfl [vmem:[#allocation1 + $0x18] sm:$0xff pattern:$0x73625140]
      %251 = vrot.lane.b32.xlu0 %v243, 127
      %v252 = vpop.permute.xlu0 %251
      %253 = vrot.lane.b32.xlu0 %v245, 127
      %v254 = vpop.permute.xlu0 %253
      %255 = vrot.lane.b32.xlu0 %v247, 127
      %v256 = vpop.permute.xlu0 %255
      %257 = vrot.lane.b32.xlu0 %v249, 127
      %v258 = vpop.permute.xlu0 %257
      %vm259 = vcmask 1039360
      %v260 = vsel %vm259, %v252, %v254
      %v261 = vsel %vm259, %v254, %v256
      %v262 = vsel %vm259, %v256, %v258
      %v264 = vsel %vm185, %v240, 0
      %v267 = vsel %vm189, %v260, 0
      %v270 = vsel %vm189, %v261, 0
      %v273 = vsel %vm189, %v262, 0
      %275 = vmatpush.bf16.msra.mxu0 0
      %276 = vmatpush.bf16.msra.mxu0 0
      %277 = vmatpush.bf16.msra.mxu0 0
      %278 = vmatpush.bf16.msra.mxu0 0
      %279 = vmatpush.bf16.msra.mxu0 0
      %280 = vmatpush.bf16.msra.mxu0 0
      %281 = vmatpush.bf16.msra.mxu0 0
      %282 = vmatpush.bf16.msra.mxu0 %v267
      %283 = vmatmul.bf16.gmra.mxu0 %v264
      %v284 = vpop.f32.mrf.mxu0
      %v285 = vadd.f32 0.0, %v284
      %v286 = vpop.f32.mrf.mxu0
      %287 = vdwg.mxu0
      %288 = vmatpush.bf16.msra.mxu0 0
      %289 = vmatpush.bf16.msra.mxu0 0
      %290 = vmatpush.bf16.msra.mxu0 0
      %291 = vmatpush.bf16.msra.mxu0 0
      %292 = vmatpush.bf16.msra.mxu0 0
      %293 = vmatpush.bf16.msra.mxu0 0
      %294 = vmatpush.bf16.msra.mxu0 0
      %295 = vmatpush.bf16.msra.mxu0 %v270
      %296 = vmatmul.bf16.gmra.mxu0 %v264
      %v297 = vpop.f32.mrf.mxu0
      %v298 = vadd.f32 0.0, %v297
      %v299 = vpop.f32.mrf.mxu0
      %300 = vdwg.mxu0
      %301 = vmatpush.bf16.msra.mxu0 0
      %302 = vmatpush.bf16.msra.mxu0 0
      %303 = vmatpush.bf16.msra.mxu0 0
      %304 = vmatpush.bf16.msra.mxu0 0
      %305 = vmatpush.bf16.msra.mxu0 0
      %306 = vmatpush.bf16.msra.mxu0 0
      %307 = vmatpush.bf16.msra.mxu0 0
      %308 = vmatpush.bf16.msra.mxu0 %v273
      %309 = vmatmul.bf16.gmra.mxu0 %v264
      %v310 = vpop.f32.mrf.mxu0
      %v311 = vadd.f32 0.0, %v310
      %v312 = vpop.f32.mrf.mxu0
      %313 = vdwg.mxu0
      %v314 = vadd.f32 %v235, %v285
      %v315 = vadd.f32 %v236, %v298
      %v316 = vadd.f32 %v237, %v311
      %v317 = vld [vmem:[%s165] sm:$0xff]
      %s318 = scalar_lea.vmem %s1, 8
      %v319 = vld [vmem:[%s318] sm:$0xf]
      %321 = vst [vmem:[#allocation1] ss:$4 sm:$0xff] %v317
      %v322 = vld.sshfl [vmem:[#allocation1] sm:$0xff pattern:$0x73625140]
      %v324 = vld.sshfl [vmem:[#allocation1 + $0x8] sm:$0xff pattern:$0x73625140]
      %v326 = vld.sshfl [vmem:[#allocation1 + $0x10] sm:$0xff pattern:$0x73625140]
      %v328 = vld.sshfl [vmem:[#allocation1 + $0x18] sm:$0xff pattern:$0x73625140]
      %330 = vrot.lane.b32.xlu0 %v322, 126
      %v331 = vpop.permute.xlu0 %330
      %332 = vrot.lane.b32.xlu0 %v324, 126
      %v333 = vpop.permute.xlu0 %332
      %334 = vrot.lane.b32.xlu0 %v326, 126
      %v335 = vpop.permute.xlu0 %334
      %336 = vrot.lane.b32.xlu0 %v328, 126
      %v337 = vpop.permute.xlu0 %336
      %vm338 = vcmask 1031168
      %v339 = vsel %vm338, %v331, %v333
      %v340 = vsel %vm338, %v333, %v335
      %v341 = vsel %vm338, %v335, %v337
      %v343 = vsel %vm185, %v319, 0
      %v346 = vsel %vm189, %v339, 0
      %v349 = vsel %vm189, %v340, 0
      %v352 = vsel %vm189, %v341, 0
      %354 = vmatpush.bf16.msra.mxu0 0
      %355 = vmatpush.bf16.msra.mxu0 0
      %356 = vmatpush.bf16.msra.mxu0 0
      %357 = vmatpush.bf16.msra.mxu0 0
      %358 = vmatpush.bf16.msra.mxu0 0
      %359 = vmatpush.bf16.msra.mxu0 0
      %360 = vmatpush.bf16.msra.mxu0 0
      %361 = vmatpush.bf16.msra.mxu0 %v346
      %362 = vmatmul.bf16.gmra.mxu0 %v343
      %v363 = vpop.f32.mrf.mxu0
      %v364 = vadd.f32 0.0, %v363
      %v365 = vpop.f32.mrf.mxu0
      %366 = vdwg.mxu0
      %367 = vmatpush.bf16.msra.mxu0 0
      %368 = vmatpush.bf16.msra.mxu0 0
      %369 = vmatpush.bf16.msra.mxu0 0
      %370 = vmatpush.bf16.msra.mxu0 0
      %371 = vmatpush.bf16.msra.mxu0 0
      %372 = vmatpush.bf16.msra.mxu0 0
      %373 = vmatpush.bf16.msra.mxu0 0
      %374 = vmatpush.bf16.msra.mxu0 %v349
      %375 = vmatmul.bf16.gmra.mxu0 %v343
      %v376 = vpop.f32.mrf.mxu0
      %v377 = vadd.f32 0.0, %v376
      %v378 = vpop.f32.mrf.mxu0
      %379 = vdwg.mxu0
      %380 = vmatpush.bf16.msra.mxu0 0
      %381 = vmatpush.bf16.msra.mxu0 0
      %382 = vmatpush.bf16.msra.mxu0 0
      %383 = vmatpush.bf16.msra.mxu0 0
      %384 = vmatpush.bf16.msra.mxu0 0
      %385 = vmatpush.bf16.msra.mxu0 0
      %386 = vmatpush.bf16.msra.mxu0 0
      %387 = vmatpush.bf16.msra.mxu0 %v352
      %388 = vmatmul.bf16.gmra.mxu0 %v343
      %v389 = vpop.f32.mrf.mxu0
      %v390 = vadd.f32 0.0, %v389
      %v391 = vpop.f32.mrf.mxu0
      %392 = vdwg.mxu0
      %v393 = vadd.f32 %v314, %v364
      %v394 = vadd.f32 %v315, %v377
      %v395 = vadd.f32 %v316, %v390
      %v396 = vld [vmem:[%s165] sm:$0xff]
      %s397 = scalar_lea.vmem %s1, 12
      %v398 = vld [vmem:[%s397] sm:$0xf]
      %400 = vst [vmem:[#allocation1] ss:$4 sm:$0xff] %v396
      %v401 = vld.sshfl [vmem:[#allocation1] sm:$0xff pattern:$0x73625140]
      %v403 = vld.sshfl [vmem:[#allocation1 + $0x8] sm:$0xff pattern:$0x73625140]
      %v405 = vld.sshfl [vmem:[#allocation1 + $0x10] sm:$0xff pattern:$0x73625140]
      %v407 = vld.sshfl [vmem:[#allocation1 + $0x18] sm:$0xff pattern:$0x73625140]
      %409 = vrot.lane.b32.xlu0 %v401, 110
      %v410 = vpop.permute.xlu0 %409
      %411 = vrot.lane.b32.xlu0 %v403, 110
      %v412 = vpop.permute.xlu0 %411
      %413 = vrot.lane.b32.xlu0 %v405, 110
      %v414 = vpop.permute.xlu0 %413
      %415 = vrot.lane.b32.xlu0 %v407, 110
      %v416 = vpop.permute.xlu0 %415
      %vm417 = vcmask 900096
      %v418 = vsel %vm417, %v410, %v412
      %v419 = vsel %vm417, %v412, %v414
      %v420 = vsel %vm417, %v414, %v416
      %v422 = vsel %vm185, %v398, 0
      %v425 = vsel %vm189, %v418, 0
      %v428 = vsel %vm189, %v419, 0
      %v431 = vsel %vm189, %v420, 0
      %433 = vmatpush.bf16.msra.mxu0 0
      %434 = vmatpush.bf16.msra.mxu0 0
      %435 = vmatpush.bf16.msra.mxu0 0
      %436 = vmatpush.bf16.msra.mxu0 0
      %437 = vmatpush.bf16.msra.mxu0 0
      %438 = vmatpush.bf16.msra.mxu0 0
      %439 = vmatpush.bf16.msra.mxu0 0
      %440 = vmatpush.bf16.msra.mxu0 %v425
      %441 = vmatmul.bf16.gmra.mxu0 %v422
      %v442 = vpop.f32.mrf.mxu0
      %v443 = vadd.f32 0.0, %v442
      %v444 = vpop.f32.mrf.mxu0
      %445 = vdwg.mxu0
      %446 = vmatpush.bf16.msra.mxu0 0
      %447 = vmatpush.bf16.msra.mxu0 0
      %448 = vmatpush.bf16.msra.mxu0 0
      %449 = vmatpush.bf16.msra.mxu0 0
      %450 = vmatpush.bf16.msra.mxu0 0
      %451 = vmatpush.bf16.msra.mxu0 0
      %452 = vmatpush.bf16.msra.mxu0 0
      %453 = vmatpush.bf16.msra.mxu0 %v428
      %454 = vmatmul.bf16.gmra.mxu0 %v422
      %v455 = vpop.f32.mrf.mxu0
      %v456 = vadd.f32 0.0, %v455
      %v457 = vpop.f32.mrf.mxu0
      %458 = vdwg.mxu0
      %459 = vmatpush.bf16.msra.mxu0 0
      %460 = vmatpush.bf16.msra.mxu0 0
      %461 = vmatpush.bf16.msra.mxu0 0
      %462 = vmatpush.bf16.msra.mxu0 0
      %463 = vmatpush.bf16.msra.mxu0 0
      %464 = vmatpush.bf16.msra.mxu0 0
      %465 = vmatpush.bf16.msra.mxu0 0
      %466 = vmatpush.bf16.msra.mxu0 %v431
      %467 = vmatmul.bf16.gmra.mxu0 %v422
      %v468 = vpop.f32.mrf.mxu0
      %v469 = vadd.f32 0.0, %v468
      %v470 = vpop.f32.mrf.mxu0
      %471 = vdwg.mxu0
      %v472 = vadd.f32 %v393, %v443
      %v473 = vadd.f32 %v394, %v456
      %v474 = vadd.f32 %v395, %v469
      %v475 = vld [vmem:[%s165] sm:$0xff]
      %s476 = scalar_lea.vmem %s1, 16
      %v477 = vld [vmem:[%s476] sm:$0xf]
      %479 = vst [vmem:[#allocation1] ss:$4 sm:$0xff] %v475
      %v480 = vld.sshfl [vmem:[#allocation1] sm:$0xff pattern:$0x73625140]
      %v482 = vld.sshfl [vmem:[#allocation1 + $0x8] sm:$0xff pattern:$0x73625140]
      %v484 = vld.sshfl [vmem:[#allocation1 + $0x10] sm:$0xff pattern:$0x73625140]
      %v486 = vld.sshfl [vmem:[#allocation1 + $0x18] sm:$0xff pattern:$0x73625140]
      %488 = vrot.lane.b32.xlu0 %v480, 109
      %v489 = vpop.permute.xlu0 %488
      %490 = vrot.lane.b32.xlu0 %v482, 109
      %v491 = vpop.permute.xlu0 %490
      %492 = vrot.lane.b32.xlu0 %v484, 109
      %v493 = vpop.permute.xlu0 %492
      %494 = vrot.lane.b32.xlu0 %v486, 109
      %v495 = vpop.permute.xlu0 %494
      %vm496 = vcmask 891904
      %v497 = vsel %vm496, %v489, %v491
      %v498 = vsel %vm496, %v491, %v493
      %v499 = vsel %vm496, %v493, %v495
      %v501 = vsel %vm185, %v477, 0
      %v504 = vsel %vm189, %v497, 0
      %v507 = vsel %vm189, %v498, 0
      %v510 = vsel %vm189, %v499, 0
      %512 = vmatpush.bf16.msra.mxu0 0
      %513 = vmatpush.bf16.msra.mxu0 0
      %514 = vmatpush.bf16.msra.mxu0 0
      %515 = vmatpush.bf16.msra.mxu0 0
      %516 = vmatpush.bf16.msra.mxu0 0
      %517 = vmatpush.bf16.msra.mxu0 0
      %518 = vmatpush.bf16.msra.mxu0 0
      %519 = vmatpush.bf16.msra.mxu0 %v504
      %520 = vmatmul.bf16.gmra.mxu0 %v501
      %v521 = vpop.f32.mrf.mxu0
      %v522 = vadd.f32 0.0, %v521
      %v523 = vpop.f32.mrf.mxu0
      %524 = vdwg.mxu0
      %525 = vmatpush.bf16.msra.mxu0 0
      %526 = vmatpush.bf16.msra.mxu0 0
      %527 = vmatpush.bf16.msra.mxu0 0
      %528 = vmatpush.bf16.msra.mxu0 0
      %529 = vmatpush.bf16.msra.mxu0 0
      %530 = vmatpush.bf16.msra.mxu0 0
      %531 = vmatpush.bf16.msra.mxu0 0
      %532 = vmatpush.bf16.msra.mxu0 %v507
      %533 = vmatmul.bf16.gmra.mxu0 %v501
      %v534 = vpop.f32.mrf.mxu0
      %v535 = vadd.f32 0.0, %v534
      %v536 = vpop.f32.mrf.mxu0
      %537 = vdwg.mxu0
      %538 = vmatpush.bf16.msra.mxu0 0
      %539 = vmatpush.bf16.msra.mxu0 0
      %540 = vmatpush.bf16.msra.mxu0 0
      %541 = vmatpush.bf16.msra.mxu0 0
      %542 = vmatpush.bf16.msra.mxu0 0
      %543 = vmatpush.bf16.msra.mxu0 0
      %544 = vmatpush.bf16.msra.mxu0 0
      %545 = vmatpush.bf16.msra.mxu0 %v510
      %546 = vmatmul.bf16.gmra.mxu0 %v501
      %v547 = vpop.f32.mrf.mxu0
      %v548 = vadd.f32 0.0, %v547
      %v549 = vpop.f32.mrf.mxu0
      %550 = vdwg.mxu0
      %v551 = vadd.f32 %v472, %v522
      %v552 = vadd.f32 %v473, %v535
      %v553 = vadd.f32 %v474, %v548
      %v554 = vld [vmem:[%s165] sm:$0xff]
      %s555 = scalar_lea.vmem %s1, 20
      %v556 = vld [vmem:[%s555] sm:$0xf]
      %558 = vst [vmem:[#allocation1] ss:$4 sm:$0xff] %v554
      %v559 = vld.sshfl [vmem:[#allocation1] sm:$0xff pattern:$0x73625140]
      %v561 = vld.sshfl [vmem:[#allocation1 + $0x8] sm:$0xff pattern:$0x73625140]
      %v563 = vld.sshfl [vmem:[#allocation1 + $0x10] sm:$0xff pattern:$0x73625140]
      %v565 = vld.sshfl [vmem:[#allocation1 + $0x18] sm:$0xff pattern:$0x73625140]
      %567 = vrot.lane.b32.xlu0 %v559, 108
      %v568 = vpop.permute.xlu0 %567
      %569 = vrot.lane.b32.xlu0 %v561, 108
      %v570 = vpop.permute.xlu0 %569
      %571 = vrot.lane.b32.xlu0 %v563, 108
      %v572 = vpop.permute.xlu0 %571
      %573 = vrot.lane.b32.xlu0 %v565, 108
      %v574 = vpop.permute.xlu0 %573
      %vm575 = vcmask 883712
      %v576 = vsel %vm575, %v568, %v570
      %v577 = vsel %vm575, %v570, %v572
      %v578 = vsel %vm575, %v572, %v574
      %v580 = vsel %vm185, %v556, 0
      %v583 = vsel %vm189, %v576, 0
      %v586 = vsel %vm189, %v577, 0
      %v589 = vsel %vm189, %v578, 0
      %591 = vmatpush.bf16.msra.mxu0 0
      %592 = vmatpush.bf16.msra.mxu0 0
      %593 = vmatpush.bf16.msra.mxu0 0
      %594 = vmatpush.bf16.msra.mxu0 0
      %595 = vmatpush.bf16.msra.mxu0 0
      %596 = vmatpush.bf16.msra.mxu0 0
      %597 = vmatpush.bf16.msra.mxu0 0
      %598 = vmatpush.bf16.msra.mxu0 %v583
      %599 = vmatmul.bf16.gmra.mxu0 %v580
      %v600 = vpop.f32.mrf.mxu0
      %v601 = vadd.f32 0.0, %v600
      %v602 = vpop.f32.mrf.mxu0
      %603 = vdwg.mxu0
      %604 = vmatpush.bf16.msra.mxu0 0
      %605 = vmatpush.bf16.msra.mxu0 0
      %606 = vmatpush.bf16.msra.mxu0 0
      %607 = vmatpush.bf16.msra.mxu0 0
      %608 = vmatpush.bf16.msra.mxu0 0
      %609 = vmatpush.bf16.msra.mxu0 0
      %610 = vmatpush.bf16.msra.mxu0 0
      %611 = vmatpush.bf16.msra.mxu0 %v586
      %612 = vmatmul.bf16.gmra.mxu0 %v580
      %v613 = vpop.f32.mrf.mxu0
      %v614 = vadd.f32 0.0, %v613
      %v615 = vpop.f32.mrf.mxu0
      %616 = vdwg.mxu0
      %617 = vmatpush.bf16.msra.mxu0 0
      %618 = vmatpush.bf16.msra.mxu0 0
      %619 = vmatpush.bf16.msra.mxu0 0
      %620 = vmatpush.bf16.msra.mxu0 0
      %621 = vmatpush.bf16.msra.mxu0 0
      %622 = vmatpush.bf16.msra.mxu0 0
      %623 = vmatpush.bf16.msra.mxu0 0
      %624 = vmatpush.bf16.msra.mxu0 %v589
      %625 = vmatmul.bf16.gmra.mxu0 %v580
      %v626 = vpop.f32.mrf.mxu0
      %v627 = vadd.f32 0.0, %v626
      %v628 = vpop.f32.mrf.mxu0
      %629 = vdwg.mxu0
      %v630 = vadd.f32 %v551, %v601
      %v631 = vadd.f32 %v552, %v614
      %v632 = vadd.f32 %v553, %v627
      %v633 = vld [vmem:[%s165] sm:$0xff]
      %s634 = scalar_lea.vmem %s1, 24
      %v635 = vld [vmem:[%s634] sm:$0xf]
      %637 = vst [vmem:[#allocation1] ss:$4 sm:$0xff] %v633
      %v638 = vld.sshfl [vmem:[#allocation1] sm:$0xff pattern:$0x73625140]
      %v640 = vld.sshfl [vmem:[#allocation1 + $0x8] sm:$0xff pattern:$0x73625140]
      %v642 = vld.sshfl [vmem:[#allocation1 + $0x10] sm:$0xff pattern:$0x73625140]
      %v644 = vld.sshfl [vmem:[#allocation1 + $0x18] sm:$0xff pattern:$0x73625140]
      %646 = vrot.lane.b32.xlu0 %v638, 92
      %v647 = vpop.permute.xlu0 %646
      %648 = vrot.lane.b32.xlu0 %v640, 92
      %v649 = vpop.permute.xlu0 %648
      %650 = vrot.lane.b32.xlu0 %v642, 92
      %v651 = vpop.permute.xlu0 %650
      %652 = vrot.lane.b32.xlu0 %v644, 92
      %v653 = vpop.permute.xlu0 %652
      %vm654 = vcmask 752640
      %v655 = vsel %vm654, %v647, %v649
      %v656 = vsel %vm654, %v649, %v651
      %v657 = vsel %vm654, %v651, %v653
      %v659 = vsel %vm185, %v635, 0
      %v662 = vsel %vm189, %v655, 0
      %v665 = vsel %vm189, %v656, 0
      %v668 = vsel %vm189, %v657, 0
      %670 = vmatpush.bf16.msra.mxu0 0
      %671 = vmatpush.bf16.msra.mxu0 0
      %672 = vmatpush.bf16.msra.mxu0 0
      %673 = vmatpush.bf16.msra.mxu0 0
      %674 = vmatpush.bf16.msra.mxu0 0
      %675 = vmatpush.bf16.msra.mxu0 0
      %676 = vmatpush.bf16.msra.mxu0 0
      %677 = vmatpush.bf16.msra.mxu0 %v662
      %678 = vmatmul.bf16.gmra.mxu0 %v659
      %v679 = vpop.f32.mrf.mxu0
      %v680 = vadd.f32 0.0, %v679
      %v681 = vpop.f32.mrf.mxu0
      %682 = vdwg.mxu0
      %683 = vmatpush.bf16.msra.mxu0 0
      %684 = vmatpush.bf16.msra.mxu0 0
      %685 = vmatpush.bf16.msra.mxu0 0
      %686 = vmatpush.bf16.msra.mxu0 0
      %687 = vmatpush.bf16.msra.mxu0 0
      %688 = vmatpush.bf16.msra.mxu0 0
      %689 = vmatpush.bf16.msra.mxu0 0
      %690 = vmatpush.bf16.msra.mxu0 %v665
      %691 = vmatmul.bf16.gmra.mxu0 %v659
      %v692 = vpop.f32.mrf.mxu0
      %v693 = vadd.f32 0.0, %v692
      %v694 = vpop.f32.mrf.mxu0
      %695 = vdwg.mxu0
      %696 = vmatpush.bf16.msra.mxu0 0
      %697 = vmatpush.bf16.msra.mxu0 0
      %698 = vmatpush.bf16.msra.mxu0 0
      %699 = vmatpush.bf16.msra.mxu0 0
      %700 = vmatpush.bf16.msra.mxu0 0
      %701 = vmatpush.bf16.msra.mxu0 0
      %702 = vmatpush.bf16.msra.mxu0 0
      %703 = vmatpush.bf16.msra.mxu0 %v668
      %704 = vmatmul.bf16.gmra.mxu0 %v659
      %v705 = vpop.f32.mrf.mxu0
      %v706 = vadd.f32 0.0, %v705
      %v707 = vpop.f32.mrf.mxu0
      %708 = vdwg.mxu0
      %v709 = vadd.f32 %v630, %v680
      %v710 = vadd.f32 %v631, %v693
      %v711 = vadd.f32 %v632, %v706
      %v712 = vld [vmem:[%s165] sm:$0xff]
      %s713 = scalar_lea.vmem %s1, 28
      %v714 = vld [vmem:[%s713] sm:$0xf]
      %716 = vst [vmem:[#allocation1] ss:$4 sm:$0xff] %v712
      %v717 = vld.sshfl [vmem:[#allocation1] sm:$0xff pattern:$0x73625140]
      %v719 = vld.sshfl [vmem:[#allocation1 + $0x8] sm:$0xff pattern:$0x73625140]
      %v721 = vld.sshfl [vmem:[#allocation1 + $0x10] sm:$0xff pattern:$0x73625140]
      %v723 = vld.sshfl [vmem:[#allocation1 + $0x18] sm:$0xff pattern:$0x73625140]
      %725 = vrot.lane.b32.xlu0 %v717, 91
      %v726 = vpop.permute.xlu0 %725
      %727 = vrot.lane.b32.xlu0 %v719, 91
      %v728 = vpop.permute.xlu0 %727
      %729 = vrot.lane.b32.xlu0 %v721, 91
      %v730 = vpop.permute.xlu0 %729
      %731 = vrot.lane.b32.xlu0 %v723, 91
      %v732 = vpop.permute.xlu0 %731
      %vm733 = vcmask 744448
      %v734 = vsel %vm733, %v726, %v728
      %v735 = vsel %vm733, %v728, %v730
      %v736 = vsel %vm733, %v730, %v732
      %v738 = vsel %vm185, %v714, 0
      %v741 = vsel %vm189, %v734, 0
      %v744 = vsel %vm189, %v735, 0
      %v747 = vsel %vm189, %v736, 0
      %749 = vmatpush.bf16.msra.mxu0 0
      %750 = vmatpush.bf16.msra.mxu0 0
      %751 = vmatpush.bf16.msra.mxu0 0
      %752 = vmatpush.bf16.msra.mxu0 0
      %753 = vmatpush.bf16.msra.mxu0 0
      %754 = vmatpush.bf16.msra.mxu0 0
      %755 = vmatpush.bf16.msra.mxu0 0
      %756 = vmatpush.bf16.msra.mxu0 %v741
      %757 = vmatmul.bf16.gmra.mxu0 %v738
      %v758 = vpop.f32.mrf.mxu0
      %v759 = vadd.f32 0.0, %v758
      %v760 = vpop.f32.mrf.mxu0
      %761 = vdwg.mxu0
      %762 = vmatpush.bf16.msra.mxu0 0
      %763 = vmatpush.bf16.msra.mxu0 0
      %764 = vmatpush.bf16.msra.mxu0 0
      %765 = vmatpush.bf16.msra.mxu0 0
      %766 = vmatpush.bf16.msra.mxu0 0
      %767 = vmatpush.bf16.msra.mxu0 0
      %768 = vmatpush.bf16.msra.mxu0 0
      %769 = vmatpush.bf16.msra.mxu0 %v744
      %770 = vmatmul.bf16.gmra.mxu0 %v738
      %v771 = vpop.f32.mrf.mxu0
      %v772 = vadd.f32 0.0, %v771
      %v773 = vpop.f32.mrf.mxu0
      %774 = vdwg.mxu0
      %775 = vmatpush.bf16.msra.mxu0 0
      %776 = vmatpush.bf16.msra.mxu0 0
      %777 = vmatpush.bf16.msra.mxu0 0
      %778 = vmatpush.bf16.msra.mxu0 0
      %779 = vmatpush.bf16.msra.mxu0 0
      %780 = vmatpush.bf16.msra.mxu0 0
      %781 = vmatpush.bf16.msra.mxu0 0
      %782 = vmatpush.bf16.msra.mxu0 %v747
      %783 = vmatmul.bf16.gmra.mxu0 %v738
      %v784 = vpop.f32.mrf.mxu0
      %v785 = vadd.f32 0.0, %v784
      %v786 = vpop.f32.mrf.mxu0
      %787 = vdwg.mxu0
      %v788 = vadd.f32 %v709, %v759
      %v789 = vadd.f32 %v710, %v772
      %v790 = vadd.f32 %v711, %v785
      %v791 = vld [vmem:[%s165] sm:$0xff]
      %s792 = scalar_lea.vmem %s1, 32
      %v793 = vld [vmem:[%s792] sm:$0xf]
      %795 = vst [vmem:[#allocation1] ss:$4 sm:$0xff] %v791
      %v796 = vld.sshfl [vmem:[#allocation1] sm:$0xff pattern:$0x73625140]
      %v798 = vld.sshfl [vmem:[#allocation1 + $0x8] sm:$0xff pattern:$0x73625140]
      %v800 = vld.sshfl [vmem:[#allocation1 + $0x10] sm:$0xff pattern:$0x73625140]
      %v802 = vld.sshfl [vmem:[#allocation1 + $0x18] sm:$0xff pattern:$0x73625140]
      %804 = vrot.lane.b32.xlu0 %v796, 90
      %v805 = vpop.permute.xlu0 %804
      %806 = vrot.lane.b32.xlu0 %v798, 90
      %v807 = vpop.permute.xlu0 %806
      %808 = vrot.lane.b32.xlu0 %v800, 90
      %v809 = vpop.permute.xlu0 %808
      %810 = vrot.lane.b32.xlu0 %v802, 90
      %v811 = vpop.permute.xlu0 %810
      %vm812 = vcmask 736256
      %v813 = vsel %vm812, %v805, %v807
      %v814 = vsel %vm812, %v807, %v809
      %v815 = vsel %vm812, %v809, %v811
      %v817 = vsel %vm185, %v793, 0
      %v820 = vsel %vm189, %v813, 0
      %v823 = vsel %vm189, %v814, 0
      %v826 = vsel %vm189, %v815, 0
      %828 = vmatpush.bf16.msra.mxu0 0
      %829 = vmatpush.bf16.msra.mxu0 0
      %830 = vmatpush.bf16.msra.mxu0 0
      %831 = vmatpush.bf16.msra.mxu0 0
      %832 = vmatpush.bf16.msra.mxu0 0
      %833 = vmatpush.bf16.msra.mxu0 0
      %834 = vmatpush.bf16.msra.mxu0 0
      %835 = vmatpush.bf16.msra.mxu0 %v820
      %836 = vmatmul.bf16.gmra.mxu0 %v817
      %v837 = vpop.f32.mrf.mxu0
      %v838 = vadd.f32 0.0, %v837
      %v839 = vpop.f32.mrf.mxu0
      %840 = vdwg.mxu0
      %841 = vmatpush.bf16.msra.mxu0 0
      %842 = vmatpush.bf16.msra.mxu0 0
      %843 = vmatpush.bf16.msra.mxu0 0
      %844 = vmatpush.bf16.msra.mxu0 0
      %845 = vmatpush.bf16.msra.mxu0 0
      %846 = vmatpush.bf16.msra.mxu0 0
      %847 = vmatpush.bf16.msra.mxu0 0
      %848 = vmatpush.bf16.msra.mxu0 %v823
      %849 = vmatmul.bf16.gmra.mxu0 %v817
      %v850 = vpop.f32.mrf.mxu0
      %v851 = vadd.f32 0.0, %v850
      %v852 = vpop.f32.mrf.mxu0
      %853 = vdwg.mxu0
      %854 = vmatpush.bf16.msra.mxu0 0
      %855 = vmatpush.bf16.msra.mxu0 0
      %856 = vmatpush.bf16.msra.mxu0 0
      %857 = vmatpush.bf16.msra.mxu0 0
      %858 = vmatpush.bf16.msra.mxu0 0
      %859 = vmatpush.bf16.msra.mxu0 0
      %860 = vmatpush.bf16.msra.mxu0 0
      %861 = vmatpush.bf16.msra.mxu0 %v826
      %862 = vmatmul.bf16.gmra.mxu0 %v817
      %v863 = vpop.f32.mrf.mxu0
      %v864 = vadd.f32 0.0, %v863
      %v865 = vpop.f32.mrf.mxu0
      %866 = vdwg.mxu0
      %v867 = vadd.f32 %v788, %v838
      %v868 = vadd.f32 %v789, %v851
      %v869 = vadd.f32 %v790, %v864
      %v870 = vmax.f32 %v867, 0.0
      %v871 = vmax.f32 %v868, 0.0
      %v872 = vmax.f32 %v869, 0.0
      %873 = vst [vmem:[%s170] sm:$0xff] %v870
      %874 = vst [vmem:[%s170 + $0x8] sm:$0xff] %v871
      %875 = vst [vmem:[%s170 + $0x10] sm:$0xff] %v872
      %p876 = scmp.lt.s32.totalorder %s14, 1
      %s877 = scalar_select %p876, %s14, 1
      %s878 = smul.addr %s877, 3
      %s879 = smul.addr %s878, 8
      %s880 = scalar_lea.vmem %s3, %s879
      // Predicated region
      $region33: #{conv_block_forward.1} parent=31 // pred_check
        %p881 = pneg %p100
      $region34: #{conv_block_forward.1} parent=31 // pred_check_branch
        %883 = sbr.rel (%p881) target = $region36
      $region35: #{conv_block_forward.1} parent=31 // pred_region
        _
      $region36: #{conv_block_forward.1} parent=31 // pred_fallthru
        _
    $region32: #{conv_block_forward.1} parent=5 // pred_fallthru
      _
    %p884 = scmp.le.s32.totalorder 2, %s9
    // Predicated region
    $region37: #{conv_block_forward.1} parent=5 // pred_check
      %p885 = pneg %p884
    $region38: #{conv_block_forward.1} parent=5 // pred_check_branch
      %887 = sbr.rel (%p885) target = $region40
    $region39: #{conv_block_forward.1} parent=5 // pred_region
      %s888 = ssub.s32 %s9, 2
      // Predicated region
      $region41: #{conv_block_forward.1} parent=39 // pred_check
        %p889 = pneg %p106
      $region42: #{conv_block_forward.1} parent=39 // pred_check_branch
        %891 = sbr.rel (%p889) target = $region44
      $region43: #{conv_block_forward.1} parent=39 // pred_region
        %p892 = scmp.lt.s32.totalorder %s15, 1
        %s893 = scalar_select %p892, %s15, 1
        %s894 = smul.addr %s893, 3
        %s895 = smul.addr %s894, 8
        %s896 = scalar_lea.vmem %s3, %s895
      $region44: #{conv_block_forward.1} parent=39 // pred_fallthru
        _
    $region40: #{conv_block_forward.1} parent=5 // pred_fallthru
      _
  $region6: #{conv_block_forward.1} parent=0 // loop_footer
    %s13 = sadd.s32 1, %s9
  $region7: #{conv_block_forward.1} parent=0 // loop_footer_branch
    %8 = sbr.rel target = $region3
  $region8: #{conv_block_forward.1} parent=0 // loop_exit
    _

</llo_original>
